<compile_context>
chip_gen: v7x
topology: tpu7x:2x2x1
jax: 0.10.0
libtpu: 0.0.40
codegen_flags: <defaults>
</compile_context>

<pallas_src>
import jax
import jax.numpy as jnp
from jax import lax
from jax.experimental import pallas as pl
from jax.experimental.pallas import tpu as pltpu


def resblock_kernel(x_ref, w1_ref, b1_ref, w2_ref, b2_ref, o_ref,
                    pad_ref, col_ref):
    # x_ref  : (1, C, L)   f32   one batch element (NCL, L = lane dim)
    # w*_ref : (C, K*C)    bf16  fused-tap weights (column index = k*C + c_in)
    # b*_ref : (C, 1)      f32
    # o_ref  : (1, C, L)   x dtype
    # pad_ref: (C, L+2p)   bf16  'same'-padded relu buffer (reused by both convs)
    # col_ref: (K*C, L)    bf16  im2col slab (reused by both convs)
    C, L = x_ref.shape[1], x_ref.shape[2]
    K = w1_ref.shape[1] // C
    p = K // 2

    # Zero only the 2*p halo columns; the interior is fully overwritten every
    # grid step, so nothing stale can leak between batch elements.
    if p > 0:
        pad_ref[:, 0:p] = jnp.zeros((C, p), pad_ref.dtype)
        pad_ref[:, p + L:p + L + p] = jnp.zeros((C, p), pad_ref.dtype)

    def conv_from_pad(w_ref, b_ref):
        # Gather the K shifted views of the padded activation into the bf16
        # im2col slab (tap-major along sublanes), then one bf16 MXU matmul
        # with f32 accumulation; bias add stays in f32.
        for k in range(K):  # K is a small static constant
            col_ref[k * C:(k + 1) * C, :] = pad_ref[:, k:k + L]
        acc = jnp.dot(w_ref[...], col_ref[...],
                      preferred_element_type=jnp.float32)
        return acc + b_ref[...]

    # conv1 on relu(x): ReLU + bf16 cast fused into the pad-interior store.
    pad_ref[:, p:p + L] = jnp.maximum(x_ref[0], 0.0).astype(pad_ref.dtype)
    h1 = conv_from_pad(w1_ref, b1_ref)                      # f32 (C, L)

    # conv2 on relu(h1): dot -> bias -> ReLU -> bf16 cast -> store is one
    # fused epilogue chain (no extra f32 (C, L) temp round-tripped in VMEM).
    pad_ref[:, p:p + L] = jnp.maximum(h1, 0.0).astype(pad_ref.dtype)
    h2 = conv_from_pad(w2_ref, b2_ref)                      # f32 (C, L)

    # Residual add against the raw input, exact in f32.
    o_ref[0] = (h2 + x_ref[0].astype(jnp.float32)).astype(o_ref.dtype)


def _build_resblock_call(N, C, L, K, x_dtype, weight_pipeline_mode):
    """Build the pallas_call; weight_pipeline_mode=None -> default buffering."""
    p = K // 2
    single_w = weight_pipeline_mode is not None

    # VMEM accounting: x/out blocks are double-buffered by the pipeline,
    # weights/biases are single-buffered when Buffered(1) is honored, and the
    # two bf16 scratch buffers are persistent (no double buffering).
    itemsize = jnp.dtype(x_dtype).itemsize
    wb = 1 if single_w else 2
    block_bytes = (2 * C * L * itemsize            # x block
                   + 2 * C * L * itemsize          # out block
                   + wb * 2 * (C * K * C * 2)      # two bf16 fused weights
                   + wb * 2 * (C * 4))             # two f32 biases
    scratch_bytes = C * (L + 2 * p) * 2 + K * C * L * 2  # bf16 pad + slab
    need = block_bytes + scratch_bytes
    try:
        vmem_cap = int(getattr(pltpu.get_tpu_info(), "vmem_capacity_bytes",
                               64 * 1024 * 1024))
    except Exception:
        vmem_cap = 64 * 1024 * 1024  # conservative across all generations
    vmem_limit = int(min(int(0.9 * vmem_cap),
                         max(32 * 1024 * 1024, int(1.3 * need))))

    def w_spec():
        if weight_pipeline_mode is None:
            return pl.BlockSpec((C, K * C), lambda n: (0, 0))
        return pl.BlockSpec((C, K * C), lambda n: (0, 0),
                            pipeline_mode=weight_pipeline_mode)

    def b_spec():
        if weight_pipeline_mode is None:
            return pl.BlockSpec((C, 1), lambda n: (0, 0))
        return pl.BlockSpec((C, 1), lambda n: (0, 0),
                            pipeline_mode=weight_pipeline_mode)

    return pl.pallas_call(
        resblock_kernel,
        out_shape=jax.ShapeDtypeStruct((N, C, L), x_dtype),
        grid_spec=pltpu.PrefetchScalarGridSpec(
            num_scalar_prefetch=0,
            grid=(N,),
            in_specs=[
                pl.BlockSpec((1, C, L), lambda n: (n, 0, 0)),
                w_spec(), b_spec(), w_spec(), b_spec(),
            ],
            out_specs=pl.BlockSpec((1, C, L), lambda n: (n, 0, 0)),
            scratch_shapes=[
                pltpu.VMEM((C, L + 2 * p), jnp.bfloat16),  # padded relu buf
                pltpu.VMEM((K * C, L), jnp.bfloat16),      # im2col slab
            ],
        ),
        compiler_params=pltpu.CompilerParams(
            dimension_semantics=("parallel",),
            vmem_limit_bytes=vmem_limit),
    )


def resblock_pallas(x_ncl, w1, b1, w2, b2):
    """x_ncl: (N, C, L) like PyTorch Conv1d input (f32, consumed directly —
    no transposes, no wrapper-side dtype cast of x).
    w1, w2: (C_out, C_in, K) PyTorch Conv1d weights.  b1, b2: (C,)."""
    N, C, L = x_ncl.shape
    C_out, C_in, K = w1.shape
    assert C_out == C and C_in == C, "ResBlock requires ch -> ch convs"
    assert K % 2 == 1, "ResBlock requires odd ksize for 'same' residual shapes"

    # (C_out, C_in, K) -> (C_out, K*C_in): column index = k*C_in + c_in,
    # matching the im2col slab row order built in the kernel. bf16 operands;
    # accumulation is f32 inside the kernel.
    w1_f = jnp.transpose(w1, (0, 2, 1)).reshape(C, K * C).astype(jnp.bfloat16)
    w2_f = jnp.transpose(w2, (0, 2, 1)).reshape(C, K * C).astype(jnp.bfloat16)
    b1_2 = b1.reshape(C, 1).astype(jnp.float32)
    b2_2 = b2.reshape(C, 1).astype(jnp.float32)

    args = (x_ncl, w1_f, b1_2, w2_f, b2_2)
    try:
        # Weights/biases never change across the grid: single-buffer them.
        call = _build_resblock_call(N, C, L, K, x_ncl.dtype,
                                    pl.Buffered(buffer_count=1))
        return call(*args)
    except Exception:
        # Fallback for jax versions that reject Buffered(1): default
        # (double-buffered) pipelining of the constant operands.
        call = _build_resblock_call(N, C, L, K, x_ncl.dtype, None)
        return call(*args)


def resblock_ref(x, w1, b1, w2, b2):
    """Pure-JAX reference matching the PyTorch forward (NCL, 'same' padding),
    mirroring the kernel numerics (bf16 relu activations & weights, f32
    accumulation, f32 bias and f32 residual) so the tolerance stays tight."""
    p = w1.shape[2] // 2

    def conv_on_relu(h_f32, w, b):
        a = jnp.maximum(h_f32, 0.0).astype(jnp.bfloat16)
        y = lax.conv_general_dilated(
            a, w.astype(jnp.bfloat16), (1,), [(p, p)],
            dimension_numbers=("NCH", "OIH", "NCH"),
            preferred_element_type=jnp.float32)
        return y + b[None, :, None].astype(jnp.float32)

    x32 = x.astype(jnp.float32)
    h = conv_on_relu(x32, w1, b1)
    h = conv_on_relu(h, w2, b2)
    return (h + x32).astype(x.dtype)


if __name__ == "__main__":
    N, C, L, K = 2, 4, 16, 3  # ksize must be odd

    key = jax.random.PRNGKey(0)
    kx, kw1, kb1, kw2, kb2 = jax.random.split(key, 5)

    x = jax.random.normal(kx, (N, C, L), dtype=jnp.float32)
    scale = 1.0 / jnp.sqrt(C * K)
    w1 = scale * jax.random.normal(kw1, (C, C, K), dtype=jnp.float32)
    b1 = scale * jax.random.normal(kb1, (C,), dtype=jnp.float32)
    w2 = scale * jax.random.normal(kw2, (C, C, K), dtype=jnp.float32)
    b2 = scale * jax.random.normal(kb2, (C,), dtype=jnp.float32)

    out = jax.block_until_ready(resblock_pallas(x, w1, b1, w2, b2))
    ref = jax.block_until_ready(resblock_ref(x, w1, b1, w2, b2))

    assert out.shape == (N, C, L) and out.dtype == x.dtype
    assert jnp.allclose(out, ref, atol=1e-3, rtol=1e-3), "mismatch vs reference"

    print("KERNEL_OK")
</pallas_src>

<mosaic_0001>
module attributes {stable_mosaic.version = 11 : i64} {
  func.func @resblock_kernel(%arg0: i32, %arg1: memref<1x4x16xf32, #tpu.memory_space<vmem>>, %arg2: memref<4x12xbf16, #tpu.memory_space<vmem>>, %arg3: memref<4x1xf32, #tpu.memory_space<vmem>>, %arg4: memref<4x12xbf16, #tpu.memory_space<vmem>>, %arg5: memref<4x1xf32, #tpu.memory_space<vmem>>, %arg6: memref<1x4x16xf32, #tpu.memory_space<vmem>>, %arg7: memref<4x18xbf16, #tpu.memory_space<vmem>>, %arg8: memref<12x16xbf16, #tpu.memory_space<vmem>>) attributes {dimension_semantics = [#tpu.dimension_semantics<parallel>], iteration_bounds = array<i64: 2>, scalar_prefetch = 0 : i64, scratch_operands = 2 : i64, tpu.core_type = #tpu.core_type<tc>, window_params = [{transform_indices = @transform_0, window_bounds = array<i64: 1, 4, 16>}, {pipeline_mode = #tpu.pipeline_mode<synchronous>, transform_indices = @transform_1, window_bounds = array<i64: 4, 12>}, {pipeline_mode = #tpu.pipeline_mode<synchronous>, transform_indices = @transform_2, window_bounds = array<i64: 4, 1>}, {pipeline_mode = #tpu.pipeline_mode<synchronous>, transform_indices = @transform_3, window_bounds = array<i64: 4, 12>}, {pipeline_mode = #tpu.pipeline_mode<synchronous>, transform_indices = @transform_4, window_bounds = array<i64: 4, 1>}, {transform_indices = @transform_5, window_bounds = array<i64: 1, 4, 16>}]} {
    %cst = arith.constant 0.000000e+00 : bf16
    %0 = vector.broadcast %cst : bf16 to vector<4x1xbf16>
    %c0 = arith.constant 0 : index
    %c0_0 = arith.constant 0 : index
    %1 = vector.load %arg7[%c0, %c0_0] : memref<4x18xbf16, #tpu.memory_space<vmem>>, vector<4x1xbf16>
    tpu.vector_store %arg7[%c0, %c0_0], %0 {strides = array<i32>} : memref<4x18xbf16, #tpu.memory_space<vmem>>, vector<4x1xbf16>,
    %cst_1 = arith.constant 0.000000e+00 : bf16
    %2 = vector.broadcast %cst_1 : bf16 to vector<4x1xbf16>
    %c0_2 = arith.constant 0 : index
    %c17 = arith.constant 17 : index
    %3 = vector.load %arg7[%c0_2, %c17] : memref<4x18xbf16, #tpu.memory_space<vmem>>, vector<4x1xbf16>
    tpu.vector_store %arg7[%c0_2, %c17], %2 {strides = array<i32>} : memref<4x18xbf16, #tpu.memory_space<vmem>>, vector<4x1xbf16>,
    %c0_3 = arith.constant 0 : index
    %c0_4 = arith.constant 0 : index
    %c0_5 = arith.constant 0 : index
    %4 = vector.load %arg1[%c0_3, %c0_4, %c0_5] : memref<1x4x16xf32, #tpu.memory_space<vmem>>, vector<1x4x16xf32>
    %5 = vector.shape_cast %4 : vector<1x4x16xf32> to vector<4x16xf32>
    %cst_6 = arith.constant 0.000000e+00 : f32
    %6 = vector.broadcast %cst_6 : f32 to vector<4x16xf32>
    %7 = arith.maximumf %5, %6 : vector<4x16xf32>
    %8 = arith.truncf %7 : vector<4x16xf32> to vector<4x16xbf16>
    %c0_7 = arith.constant 0 : index
    %c1 = arith.constant 1 : index
    %9 = vector.load %arg7[%c0_7, %c1] : memref<4x18xbf16, #tpu.memory_space<vmem>>, vector<4x16xbf16>
    tpu.vector_store %arg7[%c0_7, %c1], %8 {strides = array<i32>} : memref<4x18xbf16, #tpu.memory_space<vmem>>, vector<4x16xbf16>,
    %c0_8 = arith.constant 0 : index
    %c0_9 = arith.constant 0 : index
    %10 = vector.load %arg7[%c0_8, %c0_9] : memref<4x18xbf16, #tpu.memory_space<vmem>>, vector<4x16xbf16>
    %c0_10 = arith.constant 0 : index
    %c0_11 = arith.constant 0 : index
    %11 = vector.load %arg8[%c0_10, %c0_11] : memref<12x16xbf16, #tpu.memory_space<vmem>>, vector<4x16xbf16>
    tpu.vector_store %arg8[%c0_10, %c0_11], %10 {strides = array<i32>} : memref<12x16xbf16, #tpu.memory_space<vmem>>, vector<4x16xbf16>,
    %c0_12 = arith.constant 0 : index
    %c1_13 = arith.constant 1 : index
    %12 = vector.load %arg7[%c0_12, %c1_13] : memref<4x18xbf16, #tpu.memory_space<vmem>>, vector<4x16xbf16>
    %c4 = arith.constant 4 : index
    %c0_14 = arith.constant 0 : index
    %13 = vector.load %arg8[%c4, %c0_14] : memref<12x16xbf16, #tpu.memory_space<vmem>>, vector<4x16xbf16>
    tpu.vector_store %arg8[%c4, %c0_14], %12 {strides = array<i32>} : memref<12x16xbf16, #tpu.memory_space<vmem>>, vector<4x16xbf16>,
    %c0_15 = arith.constant 0 : index
    %c2 = arith.constant 2 : index
    %14 = vector.load %arg7[%c0_15, %c2] : memref<4x18xbf16, #tpu.memory_space<vmem>>, vector<4x16xbf16>
    %c8 = arith.constant 8 : index
    %c0_16 = arith.constant 0 : index
    %15 = vector.load %arg8[%c8, %c0_16] : memref<12x16xbf16, #tpu.memory_space<vmem>>, vector<4x16xbf16>
    tpu.vector_store %arg8[%c8, %c0_16], %14 {strides = array<i32>} : memref<12x16xbf16, #tpu.memory_space<vmem>>, vector<4x16xbf16>,
    %c0_17 = arith.constant 0 : index
    %c0_18 = arith.constant 0 : index
    %16 = vector.load %arg2[%c0_17, %c0_18] : memref<4x12xbf16, #tpu.memory_space<vmem>>, vector<4x12xbf16>
    %c0_19 = arith.constant 0 : index
    %c0_20 = arith.constant 0 : index
    %17 = vector.load %arg8[%c0_19, %c0_20] : memref<12x16xbf16, #tpu.memory_space<vmem>>, vector<12x16xbf16>
    %cst_21 = arith.constant dense<0.000000e+00> : vector<4x16xf32>
    %18 = tpu.matmul %16, %17, %cst_21 {dimension_numbers = #tpu.dot_dimension_numbers<[1], [0], [0], [1], [0, 0, 1, 1], [], []>} : vector<4x12xbf16>, vector<12x16xbf16>, vector<4x16xf32> -> vector<4x16xf32>
    %c0_22 = arith.constant 0 : index
    %c0_23 = arith.constant 0 : index
    %19 = vector.load %arg3[%c0_22, %c0_23] : memref<4x1xf32, #tpu.memory_space<vmem>>, vector<4x1xf32>
    %20 = vector.broadcast %19 : vector<4x1xf32> to vector<4x16xf32>
    %21 = arith.addf %18, %20 : vector<4x16xf32>
    %cst_24 = arith.constant 0.000000e+00 : f32
    %22 = vector.broadcast %cst_24 : f32 to vector<4x16xf32>
    %23 = arith.maximumf %21, %22 : vector<4x16xf32>
    %24 = arith.truncf %23 : vector<4x16xf32> to vector<4x16xbf16>
    %c0_25 = arith.constant 0 : index
    %c1_26 = arith.constant 1 : index
    %25 = vector.load %arg7[%c0_25, %c1_26] : memref<4x18xbf16, #tpu.memory_space<vmem>>, vector<4x16xbf16>
    tpu.vector_store %arg7[%c0_25, %c1_26], %24 {strides = array<i32>} : memref<4x18xbf16, #tpu.memory_space<vmem>>, vector<4x16xbf16>,
    %c0_27 = arith.constant 0 : index
    %c0_28 = arith.constant 0 : index
    %26 = vector.load %arg7[%c0_27, %c0_28] : memref<4x18xbf16, #tpu.memory_space<vmem>>, vector<4x16xbf16>
    %c0_29 = arith.constant 0 : index
    %c0_30 = arith.constant 0 : index
    %27 = vector.load %arg8[%c0_29, %c0_30] : memref<12x16xbf16, #tpu.memory_space<vmem>>, vector<4x16xbf16>
    tpu.vector_store %arg8[%c0_29, %c0_30], %26 {strides = array<i32>} : memref<12x16xbf16, #tpu.memory_space<vmem>>, vector<4x16xbf16>,
    %c0_31 = arith.constant 0 : index
    %c1_32 = arith.constant 1 : index
    %28 = vector.load %arg7[%c0_31, %c1_32] : memref<4x18xbf16, #tpu.memory_space<vmem>>, vector<4x16xbf16>
    %c4_33 = arith.constant 4 : index
    %c0_34 = arith.constant 0 : index
    %29 = vector.load %arg8[%c4_33, %c0_34] : memref<12x16xbf16, #tpu.memory_space<vmem>>, vector<4x16xbf16>
    tpu.vector_store %arg8[%c4_33, %c0_34], %28 {strides = array<i32>} : memref<12x16xbf16, #tpu.memory_space<vmem>>, vector<4x16xbf16>,
    %c0_35 = arith.constant 0 : index
    %c2_36 = arith.constant 2 : index
    %30 = vector.load %arg7[%c0_35, %c2_36] : memref<4x18xbf16, #tpu.memory_space<vmem>>, vector<4x16xbf16>
    %c8_37 = arith.constant 8 : index
    %c0_38 = arith.constant 0 : index
    %31 = vector.load %arg8[%c8_37, %c0_38] : memref<12x16xbf16, #tpu.memory_space<vmem>>, vector<4x16xbf16>
    tpu.vector_store %arg8[%c8_37, %c0_38], %30 {strides = array<i32>} : memref<12x16xbf16, #tpu.memory_space<vmem>>, vector<4x16xbf16>,
    %c0_39 = arith.constant 0 : index
    %c0_40 = arith.constant 0 : index
    %32 = vector.load %arg4[%c0_39, %c0_40] : memref<4x12xbf16, #tpu.memory_space<vmem>>, vector<4x12xbf16>
    %c0_41 = arith.constant 0 : index
    %c0_42 = arith.constant 0 : index
    %33 = vector.load %arg8[%c0_41, %c0_42] : memref<12x16xbf16, #tpu.memory_space<vmem>>, vector<12x16xbf16>
    %cst_43 = arith.constant dense<0.000000e+00> : vector<4x16xf32>
    %34 = tpu.matmul %32, %33, %cst_43 {dimension_numbers = #tpu.dot_dimension_numbers<[1], [0], [0], [1], [0, 0, 1, 1], [], []>} : vector<4x12xbf16>, vector<12x16xbf16>, vector<4x16xf32> -> vector<4x16xf32>
    %c0_44 = arith.constant 0 : index
    %c0_45 = arith.constant 0 : index
    %35 = vector.load %arg5[%c0_44, %c0_45] : memref<4x1xf32, #tpu.memory_space<vmem>>, vector<4x1xf32>
    %36 = vector.broadcast %35 : vector<4x1xf32> to vector<4x16xf32>
    %37 = arith.addf %34, %36 : vector<4x16xf32>
    %c0_46 = arith.constant 0 : index
    %c0_47 = arith.constant 0 : index
    %c0_48 = arith.constant 0 : index
    %38 = vector.load %arg1[%c0_46, %c0_47, %c0_48] : memref<1x4x16xf32, #tpu.memory_space<vmem>>, vector<1x4x16xf32>
    %39 = vector.shape_cast %38 : vector<1x4x16xf32> to vector<4x16xf32>
    %40 = arith.addf %37, %39 : vector<4x16xf32>
    %c0_49 = arith.constant 0 : index
    %c0_50 = arith.constant 0 : index
    %c0_51 = arith.constant 0 : index
    %41 = vector.load %arg6[%c0_49, %c0_50, %c0_51] : memref<1x4x16xf32, #tpu.memory_space<vmem>>, vector<1x4x16xf32>
    %42 = vector.shape_cast %41 : vector<1x4x16xf32> to vector<4x16xf32>
    %43 = vector.shape_cast %40 : vector<4x16xf32> to vector<1x4x16xf32>
    tpu.vector_store %arg6[%c0_49, %c0_50, %c0_51], %43 {strides = array<i32>} : memref<1x4x16xf32, #tpu.memory_space<vmem>>, vector<1x4x16xf32>,
    return
  }
  func.func @transform_0(%arg0: i32) -> (i32, i32, i32) {
    %c0_i32 = arith.constant 0 : i32
    %c0_i32_0 = arith.constant 0 : i32
    %c0_i32_1 = arith.constant 0 : i32
    return %arg0, %c0_i32, %c0_i32_0 : i32, i32, i32
  }
  func.func @transform_1(%arg0: i32) -> (i32, i32) {
    %c0_i32 = arith.constant 0 : i32
    %c0_i32_0 = arith.constant 0 : i32
    %c0_i32_1 = arith.constant 0 : i32
    return %c0_i32, %c0_i32_0 : i32, i32
  }
  func.func @transform_2(%arg0: i32) -> (i32, i32) {
    %c0_i32 = arith.constant 0 : i32
    %c0_i32_0 = arith.constant 0 : i32
    %c0_i32_1 = arith.constant 0 : i32
    return %c0_i32, %c0_i32_0 : i32, i32
  }
  func.func @transform_3(%arg0: i32) -> (i32, i32) {
    %c0_i32 = arith.constant 0 : i32
    %c0_i32_0 = arith.constant 0 : i32
    %c0_i32_1 = arith.constant 0 : i32
    return %c0_i32, %c0_i32_0 : i32, i32
  }
  func.func @transform_4(%arg0: i32) -> (i32, i32) {
    %c0_i32 = arith.constant 0 : i32
    %c0_i32_0 = arith.constant 0 : i32
    %c0_i32_1 = arith.constant 0 : i32
    return %c0_i32, %c0_i32_0 : i32, i32
  }
  func.func @transform_5(%arg0: i32) -> (i32, i32, i32) {
    %c0_i32 = arith.constant 0 : i32
    %c0_i32_0 = arith.constant 0 : i32
    %c0_i32_1 = arith.constant 0 : i32
    return %arg0, %c0_i32, %c0_i32_0 : i32, i32, i32
  }
}

module attributes {stable_mosaic.version = 11 : i64} {
  func.func @resblock_kernel(%arg0: i32, %arg1: memref<1x4x16xf32, #tpu.memory_space<vmem>>, %arg2: memref<4x12xbf16, #tpu.memory_space<vmem>>, %arg3: memref<4x1xf32, #tpu.memory_space<vmem>>, %arg4: memref<4x12xbf16, #tpu.memory_space<vmem>>, %arg5: memref<4x1xf32, #tpu.memory_space<vmem>>, %arg6: memref<1x4x16xf32, #tpu.memory_space<vmem>>, %arg7: memref<4x18xbf16, #tpu.memory_space<vmem>>, %arg8: memref<12x16xbf16, #tpu.memory_space<vmem>>) attributes {dimension_semantics = [#tpu.dimension_semantics<parallel>], iteration_bounds = array<i64: 2>, scalar_prefetch = 0 : i64, scratch_operands = 2 : i64, tpu.core_type = #tpu.core_type<tc>, window_params = [{transform_indices = @transform_0, window_bounds = array<i64: 1, 4, 16>}, {pipeline_mode = #tpu.pipeline_mode<synchronous>, transform_indices = @transform_1, window_bounds = array<i64: 4, 12>}, {pipeline_mode = #tpu.pipeline_mode<synchronous>, transform_indices = @transform_2, window_bounds = array<i64: 4, 1>}, {pipeline_mode = #tpu.pipeline_mode<synchronous>, transform_indices = @transform_3, window_bounds = array<i64: 4, 12>}, {pipeline_mode = #tpu.pipeline_mode<synchronous>, transform_indices = @transform_4, window_bounds = array<i64: 4, 1>}, {transform_indices = @transform_5, window_bounds = array<i64: 1, 4, 16>}]} {
    %cst = arith.constant 0.000000e+00 : bf16
    %0 = vector.broadcast %cst : bf16 to vector<4x1xbf16>
    %c0 = arith.constant 0 : index
    %c0_0 = arith.constant 0 : index
    %1 = vector.load %arg7[%c0, %c0_0] : memref<4x18xbf16, #tpu.memory_space<vmem>>, vector<4x1xbf16>
    tpu.vector_store %arg7[%c0, %c0_0], %0 {strides = array<i32>} : memref<4x18xbf16, #tpu.memory_space<vmem>>, vector<4x1xbf16>,
    %cst_1 = arith.constant 0.000000e+00 : bf16
    %2 = vector.broadcast %cst_1 : bf16 to vector<4x1xbf16>
    %c0_2 = arith.constant 0 : index
    %c17 = arith.constant 17 : index
    %3 = vector.load %arg7[%c0_2, %c17] : memref<4x18xbf16, #tpu.memory_space<vmem>>, vector<4x1xbf16>
    tpu.vector_store %arg7[%c0_2, %c17], %2 {strides = array<i32>} : memref<4x18xbf16, #tpu.memory_space<vmem>>, vector<4x1xbf16>,
    %c0_3 = arith.constant 0 : index
    %c0_4 = arith.constant 0 : index
    %c0_5 = arith.constant 0 : index
    %4 = vector.load %arg1[%c0_3, %c0_4, %c0_5] : memref<1x4x16xf32, #tpu.memory_space<vmem>>, vector<1x4x16xf32>
    %5 = vector.shape_cast %4 : vector<1x4x16xf32> to vector<4x16xf32>
    %cst_6 = arith.constant 0.000000e+00 : f32
    %6 = vector.broadcast %cst_6 : f32 to vector<4x16xf32>
    %7 = arith.maximumf %5, %6 : vector<4x16xf32>
    %8 = arith.truncf %7 : vector<4x16xf32> to vector<4x16xbf16>
    %c0_7 = arith.constant 0 : index
    %c1 = arith.constant 1 : index
    %9 = vector.load %arg7[%c0_7, %c1] : memref<4x18xbf16, #tpu.memory_space<vmem>>, vector<4x16xbf16>
    tpu.vector_store %arg7[%c0_7, %c1], %8 {strides = array<i32>} : memref<4x18xbf16, #tpu.memory_space<vmem>>, vector<4x16xbf16>,
    %c0_8 = arith.constant 0 : index
    %c0_9 = arith.constant 0 : index
    %10 = vector.load %arg7[%c0_8, %c0_9] : memref<4x18xbf16, #tpu.memory_space<vmem>>, vector<4x16xbf16>
    %c0_10 = arith.constant 0 : index
    %c0_11 = arith.constant 0 : index
    %11 = vector.load %arg8[%c0_10, %c0_11] : memref<12x16xbf16, #tpu.memory_space<vmem>>, vector<4x16xbf16>
    tpu.vector_store %arg8[%c0_10, %c0_11], %10 {strides = array<i32>} : memref<12x16xbf16, #tpu.memory_space<vmem>>, vector<4x16xbf16>,
    %c0_12 = arith.constant 0 : index
    %c1_13 = arith.constant 1 : index
    %12 = vector.load %arg7[%c0_12, %c1_13] : memref<4x18xbf16, #tpu.memory_space<vmem>>, vector<4x16xbf16>
    %c4 = arith.constant 4 : index
    %c0_14 = arith.constant 0 : index
    %13 = vector.load %arg8[%c4, %c0_14] : memref<12x16xbf16, #tpu.memory_space<vmem>>, vector<4x16xbf16>
    tpu.vector_store %arg8[%c4, %c0_14], %12 {strides = array<i32>} : memref<12x16xbf16, #tpu.memory_space<vmem>>, vector<4x16xbf16>,
    %c0_15 = arith.constant 0 : index
    %c2 = arith.constant 2 : index
    %14 = vector.load %arg7[%c0_15, %c2] : memref<4x18xbf16, #tpu.memory_space<vmem>>, vector<4x16xbf16>
    %c8 = arith.constant 8 : index
    %c0_16 = arith.constant 0 : index
    %15 = vector.load %arg8[%c8, %c0_16] : memref<12x16xbf16, #tpu.memory_space<vmem>>, vector<4x16xbf16>
    tpu.vector_store %arg8[%c8, %c0_16], %14 {strides = array<i32>} : memref<12x16xbf16, #tpu.memory_space<vmem>>, vector<4x16xbf16>,
    %c0_17 = arith.constant 0 : index
    %c0_18 = arith.constant 0 : index
    %16 = vector.load %arg2[%c0_17, %c0_18] : memref<4x12xbf16, #tpu.memory_space<vmem>>, vector<4x12xbf16>
    %c0_19 = arith.constant 0 : index
    %c0_20 = arith.constant 0 : index
    %17 = vector.load %arg8[%c0_19, %c0_20] : memref<12x16xbf16, #tpu.memory_space<vmem>>, vector<12x16xbf16>
    %cst_21 = arith.constant dense<0.000000e+00> : vector<4x16xf32>
    %18 = tpu.matmul %16, %17, %cst_21 {dimension_numbers = #tpu.dot_dimension_numbers<[1], [0], [0], [1], [0, 0, 1, 1], [], []>} : vector<4x12xbf16>, vector<12x16xbf16>, vector<4x16xf32> -> vector<4x16xf32>
    %c0_22 = arith.constant 0 : index
    %c0_23 = arith.constant 0 : index
    %19 = vector.load %arg3[%c0_22, %c0_23] : memref<4x1xf32, #tpu.memory_space<vmem>>, vector<4x1xf32>
    %20 = vector.broadcast %19 : vector<4x1xf32> to vector<4x16xf32>
    %21 = arith.addf %18, %20 : vector<4x16xf32>
    %cst_24 = arith.constant 0.000000e+00 : f32
    %22 = vector.broadcast %cst_24 : f32 to vector<4x16xf32>
    %23 = arith.maximumf %21, %22 : vector<4x16xf32>
    %24 = arith.truncf %23 : vector<4x16xf32> to vector<4x16xbf16>
    %c0_25 = arith.constant 0 : index
    %c1_26 = arith.constant 1 : index
    %25 = vector.load %arg7[%c0_25, %c1_26] : memref<4x18xbf16, #tpu.memory_space<vmem>>, vector<4x16xbf16>
    tpu.vector_store %arg7[%c0_25, %c1_26], %24 {strides = array<i32>} : memref<4x18xbf16, #tpu.memory_space<vmem>>, vector<4x16xbf16>,
    %c0_27 = arith.constant 0 : index
    %c0_28 = arith.constant 0 : index
    %26 = vector.load %arg7[%c0_27, %c0_28] : memref<4x18xbf16, #tpu.memory_space<vmem>>, vector<4x16xbf16>
    %c0_29 = arith.constant 0 : index
    %c0_30 = arith.constant 0 : index
    %27 = vector.load %arg8[%c0_29, %c0_30] : memref<12x16xbf16, #tpu.memory_space<vmem>>, vector<4x16xbf16>
    tpu.vector_store %arg8[%c0_29, %c0_30], %26 {strides = array<i32>} : memref<12x16xbf16, #tpu.memory_space<vmem>>, vector<4x16xbf16>,
    %c0_31 = arith.constant 0 : index
    %c1_32 = arith.constant 1 : index
    %28 = vector.load %arg7[%c0_31, %c1_32] : memref<4x18xbf16, #tpu.memory_space<vmem>>, vector<4x16xbf16>
    %c4_33 = arith.constant 4 : index
    %c0_34 = arith.constant 0 : index
    %29 = vector.load %arg8[%c4_33, %c0_34] : memref<12x16xbf16, #tpu.memory_space<vmem>>, vector<4x16xbf16>
    tpu.vector_store %arg8[%c4_33, %c0_34], %28 {strides = array<i32>} : memref<12x16xbf16, #tpu.memory_space<vmem>>, vector<4x16xbf16>,
    %c0_35 = arith.constant 0 : index
    %c2_36 = arith.constant 2 : index
    %30 = vector.load %arg7[%c0_35, %c2_36] : memref<4x18xbf16, #tpu.memory_space<vmem>>, vector<4x16xbf16>
    %c8_37 = arith.constant 8 : index
    %c0_38 = arith.constant 0 : index
    %31 = vector.load %arg8[%c8_37, %c0_38] : memref<12x16xbf16, #tpu.memory_space<vmem>>, vector<4x16xbf16>
    tpu.vector_store %arg8[%c8_37, %c0_38], %30 {strides = array<i32>} : memref<12x16xbf16, #tpu.memory_space<vmem>>, vector<4x16xbf16>,
    %c0_39 = arith.constant 0 : index
    %c0_40 = arith.constant 0 : index
    %32 = vector.load %arg4[%c0_39, %c0_40] : memref<4x12xbf16, #tpu.memory_space<vmem>>, vector<4x12xbf16>
    %c0_41 = arith.constant 0 : index
    %c0_42 = arith.constant 0 : index
    %33 = vector.load %arg8[%c0_41, %c0_42] : memref<12x16xbf16, #tpu.memory_space<vmem>>, vector<12x16xbf16>
    %cst_43 = arith.constant dense<0.000000e+00> : vector<4x16xf32>
    %34 = tpu.matmul %32, %33, %cst_43 {dimension_numbers = #tpu.dot_dimension_numbers<[1], [0], [0], [1], [0, 0, 1, 1], [], []>} : vector<4x12xbf16>, vector<12x16xbf16>, vector<4x16xf32> -> vector<4x16xf32>
    %c0_44 = arith.constant 0 : index
    %c0_45 = arith.constant 0 : index
    %35 = vector.load %arg5[%c0_44, %c0_45] : memref<4x1xf32, #tpu.memory_space<vmem>>, vector<4x1xf32>
    %36 = vector.broadcast %35 : vector<4x1xf32> to vector<4x16xf32>
    %37 = arith.addf %34, %36 : vector<4x16xf32>
    %c0_46 = arith.constant 0 : index
    %c0_47 = arith.constant 0 : index
    %c0_48 = arith.constant 0 : index
    %38 = vector.load %arg1[%c0_46, %c0_47, %c0_48] : memref<1x4x16xf32, #tpu.memory_space<vmem>>, vector<1x4x16xf32>
    %39 = vector.shape_cast %38 : vector<1x4x16xf32> to vector<4x16xf32>
    %40 = arith.addf %37, %39 : vector<4x16xf32>
    %c0_49 = arith.constant 0 : index
    %c0_50 = arith.constant 0 : index
    %c0_51 = arith.constant 0 : index
    %41 = vector.load %arg6[%c0_49, %c0_50, %c0_51] : memref<1x4x16xf32, #tpu.memory_space<vmem>>, vector<1x4x16xf32>
    %42 = vector.shape_cast %41 : vector<1x4x16xf32> to vector<4x16xf32>
    %43 = vector.shape_cast %40 : vector<4x16xf32> to vector<1x4x16xf32>
    tpu.vector_store %arg6[%c0_49, %c0_50, %c0_51], %43 {strides = array<i32>} : memref<1x4x16xf32, #tpu.memory_space<vmem>>, vector<1x4x16xf32>,
    return
  }
  func.func @transform_0(%arg0: i32) -> (i32, i32, i32) {
    %c0_i32 = arith.constant 0 : i32
    %c0_i32_0 = arith.constant 0 : i32
    %c0_i32_1 = arith.constant 0 : i32
    return %arg0, %c0_i32, %c0_i32_0 : i32, i32, i32
  }
  func.func @transform_1(%arg0: i32) -> (i32, i32) {
    %c0_i32 = arith.constant 0 : i32
    %c0_i32_0 = arith.constant 0 : i32
    %c0_i32_1 = arith.constant 0 : i32
    return %c0_i32, %c0_i32_0 : i32, i32
  }
  func.func @transform_2(%arg0: i32) -> (i32, i32) {
    %c0_i32 = arith.constant 0 : i32
    %c0_i32_0 = arith.constant 0 : i32
    %c0_i32_1 = arith.constant 0 : i32
    return %c0_i32, %c0_i32_0 : i32, i32
  }
  func.func @transform_3(%arg0: i32) -> (i32, i32) {
    %c0_i32 = arith.constant 0 : i32
    %c0_i32_0 = arith.constant 0 : i32
    %c0_i32_1 = arith.constant 0 : i32
    return %c0_i32, %c0_i32_0 : i32, i32
  }
  func.func @transform_4(%arg0: i32) -> (i32, i32) {
    %c0_i32 = arith.constant 0 : i32
    %c0_i32_0 = arith.constant 0 : i32
    %c0_i32_1 = arith.constant 0 : i32
    return %c0_i32, %c0_i32_0 : i32, i32
  }
  func.func @transform_5(%arg0: i32) -> (i32, i32, i32) {
    %c0_i32 = arith.constant 0 : i32
    %c0_i32_0 = arith.constant 0 : i32
    %c0_i32_1 = arith.constant 0 : i32
    return %arg0, %c0_i32, %c0_i32_0 : i32, i32, i32
  }
}

</mosaic_0001>

<llo_original>
// kernel: tpu_custom_call.1
$region0: #{tpu_custom_call.1}
  #allocation0 [shape = 'u32[]', space=smem, size = 0x4, offset = 0x4, fixed_abs, tag = 'smem constant byte address 0x4 - core index']
  #allocation1 [shape = 'u32[144,128]{1,0:T(1,128)}', space=vmem, size = 0x12000, scoped, tag = 'internal scratch']
  #allocation2 [shape = 'bf16[4,18]{1,0:T(4,128)(2,1)}', space=vmem, size = 0x400, scoped, tag = 'scratch operand']
  #allocation3 [shape = 'bf16[12,16]{1,0:T(8,128)(2,1)}', space=vmem, size = 0x1000, scoped, tag = 'scratch operand']
  %s0 = inlined_call_operand.vmem [shape: f32[2,4,16], index: 0, kind: input, shape index: {}]
  %s1 = inlined_call_operand.vmem [shape: bf16[4,12], index: 1, kind: input, shape index: {}]
  %s2 = inlined_call_operand.vmem [shape: f32[4,1], index: 2, kind: input, shape index: {}]
  %s3 = inlined_call_operand.vmem [shape: bf16[4,12], index: 3, kind: input, shape index: {}]
  %s4 = inlined_call_operand.vmem [shape: f32[4,1], index: 4, kind: input, shape index: {}]
  %s5 = inlined_call_operand.hbm [shape: f32[2,4,16], index: 5, kind: output, shape index: {}]
  %s6 = sld [smem:[#allocation0]]
  $region53: #{tpu_custom_call.1} parent=0
    _
  %s8 = ssub.s32 1, %s6
  %s9 = scalar_select 0, %s8, %s6
  $region1: #{tpu_custom_call.1} parent=0
    #allocation4 [shape = 'u8[4096]{0}', space=vmem, size = 0x1000, scoped, tag = 'output window, operand 0']
    #allocation5 [shape = 's32[2]{0}', space=sflag, size = 0x8, scoped, tag = 'scoped memory for tpu_custom_call.1']
    %10 = vsyncpa [#allocation5], 0
    %s11 = scalar_lea.sflag [#allocation5], 1
    %12 = vsyncpa %s11, 0
    loop: start=0, step=1, limit=4
    $region2: #{tpu_custom_call.1} parent=1 // loop_pre_header
      _
    $region3: #{tpu_custom_call.1} parent=1 // loop_header
      %s14 = sphi 0, %s18
      %p15 = scmp.ge.s32.totalorder %s14, 4
      %s24 = sphi 0, %s26
      %s27 = sphi 0, %s24
      %s28 = sphi 0, %s27
      %s44 = sphi 0, %s28
      %s48 = sphi 0, %s48
      %s50 = sphi 0, %s48
      %s51 = sphi 0, %s50
      %s65 = sphi 0, %s51
      %s69 = sphi 0, %s69
      %s71 = sphi 0, %s69
      %s72 = sphi 0, %s71
      %s86 = sphi 0, %s72
      %s90 = sphi 0, %s90
      %s92 = sphi 0, %s90
      %s93 = sphi 0, %s92
      %s107 = sphi 0, %s93
      %s111 = sphi 0, %s111
      %s113 = sphi 0, %s111
      %s114 = sphi 0, %s113
      %s128 = sphi 0, %s114
      %s134 = sphi 0, %s136
      %s137 = sphi 0, %s134
      %s138 = sphi 0, %s137
      %s154 = sphi 0, %s138
    $region4: #{tpu_custom_call.1} parent=1 // loop_header_branch
      %17 = sbr.rel (%p15) target = $region8
    $region5: #{tpu_custom_call.1} parent=1 // loop_body
      %s19 = ssub.s32 %s14, 1
      %s20 = ssub.s32 %s14, 2
      %s21 = sadd.s32 %s14, 1
      %s22 = ssub.s32 %s14, %s21
      %p23 = scmp.eq.s32.totalorder %s22, 0
      %s25 = sadd.s32 %s24, 1
      %s26 = scalar_select %p23, %s24, %s25
      %p29 = pneg %p23
      %p30 = scmp.eq.s32.totalorder %s14, 1
      %p31 = por %p29, %p30
      %p32 = scmp.ne.s32.totalorder %s24, %s27
      %p33 = scmp.eq.s32.totalorder %s14, 0
      %p34 = por %p32, %p33
      %p35 = scmp.ne.s32.totalorder %s24, %s27
      %p36 = scmp.eq.s32.totalorder %s19, 1
      %p37 = por %p35, %p36
      %p38 = scmp.ne.s32.totalorder %s27, %s28
      %p39 = scmp.eq.s32.totalorder %s19, 0
      %p40 = por %p38, %p39
      %p41 = scmp.ne.s32.totalorder %s27, %s28
      %p42 = scmp.eq.s32.totalorder %s20, 1
      %p43 = por %p41, %p42
      %p45 = scmp.ne.s32.totalorder %s28, %s44
      %p46 = scmp.eq.s32.totalorder %s20, 0
      %p47 = por %p45, %p46
      %s49 = sadd.s32 %s48, 1
      %p52 = scmp.eq.s32.totalorder %s14, 1
      %p53 = scmp.ne.s32.totalorder %s48, %s50
      %p54 = scmp.eq.s32.totalorder %s14, 0
      %p55 = por %p53, %p54
      %p56 = scmp.ne.s32.totalorder %s48, %s50
      %p57 = scmp.eq.s32.totalorder %s19, 1
      %p58 = por %p56, %p57
      %p59 = scmp.ne.s32.totalorder %s50, %s51
      %p60 = scmp.eq.s32.totalorder %s19, 0
      %p61 = por %p59, %p60
      %p62 = scmp.ne.s32.totalorder %s50, %s51
      %p63 = scmp.eq.s32.totalorder %s20, 1
      %p64 = por %p62, %p63
      %p66 = scmp.ne.s32.totalorder %s51, %s65
      %p67 = scmp.eq.s32.totalorder %s20, 0
      %p68 = por %p66, %p67
      %s70 = sadd.s32 %s69, 1
      %p73 = scmp.eq.s32.totalorder %s14, 1
      %p74 = scmp.ne.s32.totalorder %s69, %s71
      %p75 = scmp.eq.s32.totalorder %s14, 0
      %p76 = por %p74, %p75
      %p77 = scmp.ne.s32.totalorder %s69, %s71
      %p78 = scmp.eq.s32.totalorder %s19, 1
      %p79 = por %p77, %p78
      %p80 = scmp.ne.s32.totalorder %s71, %s72
      %p81 = scmp.eq.s32.totalorder %s19, 0
      %p82 = por %p80, %p81
      %p83 = scmp.ne.s32.totalorder %s71, %s72
      %p84 = scmp.eq.s32.totalorder %s20, 1
      %p85 = por %p83, %p84
      %p87 = scmp.ne.s32.totalorder %s72, %s86
      %p88 = scmp.eq.s32.totalorder %s20, 0
      %p89 = por %p87, %p88
      %s91 = sadd.s32 %s90, 1
      %p94 = scmp.eq.s32.totalorder %s14, 1
      %p95 = scmp.ne.s32.totalorder %s90, %s92
      %p96 = scmp.eq.s32.totalorder %s14, 0
      %p97 = por %p95, %p96
      %p98 = scmp.ne.s32.totalorder %s90, %s92
      %p99 = scmp.eq.s32.totalorder %s19, 1
      %p100 = por %p98, %p99
      %p101 = scmp.ne.s32.totalorder %s92, %s93
      %p102 = scmp.eq.s32.totalorder %s19, 0
      %p103 = por %p101, %p102
      %p104 = scmp.ne.s32.totalorder %s92, %s93
      %p105 = scmp.eq.s32.totalorder %s20, 1
      %p106 = por %p104, %p105
      %p108 = scmp.ne.s32.totalorder %s93, %s107
      %p109 = scmp.eq.s32.totalorder %s20, 0
      %p110 = por %p108, %p109
      %s112 = sadd.s32 %s111, 1
      %p115 = scmp.eq.s32.totalorder %s14, 1
      %p116 = scmp.ne.s32.totalorder %s111, %s113
      %p117 = scmp.eq.s32.totalorder %s14, 0
      %p118 = por %p116, %p117
      %p119 = scmp.ne.s32.totalorder %s111, %s113
      %p120 = scmp.eq.s32.totalorder %s19, 1
      %p121 = por %p119, %p120
      %p122 = scmp.ne.s32.totalorder %s113, %s114
      %p123 = scmp.eq.s32.totalorder %s19, 0
      %p124 = por %p122, %p123
      %p125 = scmp.ne.s32.totalorder %s113, %s114
      %p126 = scmp.eq.s32.totalorder %s20, 1
      %p127 = por %p125, %p126
      %p129 = scmp.ne.s32.totalorder %s114, %s128
      %p130 = scmp.eq.s32.totalorder %s20, 0
      %p131 = por %p129, %p130
      %s132 = ssub.s32 %s14, %s21
      %p133 = scmp.eq.s32.totalorder %s132, 0
      %s135 = sadd.s32 %s134, 1
      %s136 = scalar_select %p133, %s134, %s135
      %p139 = pneg %p133
      %p140 = scmp.eq.s32.totalorder %s14, 1
      %p141 = por %p139, %p140
      %p142 = scmp.ne.s32.totalorder %s134, %s137
      %p143 = scmp.eq.s32.totalorder %s14, 0
      %p144 = por %p142, %p143
      %p145 = scmp.ne.s32.totalorder %s134, %s137
      %p146 = scmp.eq.s32.totalorder %s19, 1
      %p147 = por %p145, %p146
      %p148 = scmp.ne.s32.totalorder %s137, %s138
      %p149 = scmp.eq.s32.totalorder %s19, 0
      %p150 = por %p148, %p149
      %p151 = scmp.ne.s32.totalorder %s137, %s138
      %p152 = scmp.eq.s32.totalorder %s20, 1
      %p153 = por %p151, %p152
      %p155 = scmp.ne.s32.totalorder %s138, %s154
      %p156 = scmp.eq.s32.totalorder %s20, 0
      %p157 = por %p155, %p156
      %p158 = scmp.le.s32.totalorder 1, %s14
      %p159 = scmp.lt.s32.totalorder %s14, 3
      %p160 = pnand %p158, %p159
      %p161 = pneg %p160
      // Predicated region
      $region9: #{tpu_custom_call.1} parent=5 // pred_check
        _
      $region10: #{tpu_custom_call.1} parent=5 // pred_check_branch
        %163 = sbr.rel (%p160) target = $region12
      $region11: #{tpu_custom_call.1} parent=5 // pred_region
        %s164 = ssub.s32 %s14, 1
        // Predicated region
        $region13: #{tpu_custom_call.1} parent=11 // pred_check
          %p165 = pneg %p61
        $region14: #{tpu_custom_call.1} parent=11 // pred_check_branch
          %167 = sbr.rel (%p165) target = $region16
        $region15: #{tpu_custom_call.1} parent=11 // pred_region
          _
        $region16: #{tpu_custom_call.1} parent=11 // pred_fallthru
          _
        // Predicated region
        $region17: #{tpu_custom_call.1} parent=11 // pred_check
          %p168 = pneg %p82
        $region18: #{tpu_custom_call.1} parent=11 // pred_check_branch
          %170 = sbr.rel (%p168) target = $region20
        $region19: #{tpu_custom_call.1} parent=11 // pred_region
          _
        $region20: #{tpu_custom_call.1} parent=11 // pred_fallthru
          _
        // Predicated region
        $region21: #{tpu_custom_call.1} parent=11 // pred_check
          %p171 = pneg %p103
        $region22: #{tpu_custom_call.1} parent=11 // pred_check_branch
          %173 = sbr.rel (%p171) target = $region24
        $region23: #{tpu_custom_call.1} parent=11 // pred_region
          _
        $region24: #{tpu_custom_call.1} parent=11 // pred_fallthru
          _
        // Predicated region
        $region25: #{tpu_custom_call.1} parent=11 // pred_check
          %p174 = pneg %p124
        $region26: #{tpu_custom_call.1} parent=11 // pred_check_branch
          %176 = sbr.rel (%p174) target = $region28
        $region27: #{tpu_custom_call.1} parent=11 // pred_region
          _
        $region28: #{tpu_custom_call.1} parent=11 // pred_fallthru
          _
      $region12: #{tpu_custom_call.1} parent=5 // pred_fallthru
        _
      %p177 = scmp.lt.s32.totalorder %s14, 2
      // Predicated region
      $region29: #{tpu_custom_call.1} parent=5 // pred_check
        %p178 = pneg %p177
      $region30: #{tpu_custom_call.1} parent=5 // pred_check_branch
        %180 = sbr.rel (%p178) target = $region32
      $region31: #{tpu_custom_call.1} parent=5 // pred_region
        // Predicated region
        $region33: #{tpu_custom_call.1} parent=31 // pred_check
          %p181 = pneg %p34
        $region34: #{tpu_custom_call.1} parent=31 // pred_check_branch
          %183 = sbr.rel (%p181) target = $region36
        $region35: #{tpu_custom_call.1} parent=31 // pred_region
          %p184 = scmp.lt.s32.totalorder %s14, 1
          %s185 = scalar_select %p184, %s14, 1
          %s186 = smul.addr %s185, 4
          %s187 = scalar_lea.vmem %s0, %s186
        $region36: #{tpu_custom_call.1} parent=31 // pred_fallthru
          _
      $region32: #{tpu_custom_call.1} parent=5 // pred_fallthru
        _
      %p188 = scmp.le.s32.totalorder 1, %s14
      %p189 = scmp.lt.s32.totalorder %s14, 3
      %p190 = pnand %p188, %p189
      %p191 = pneg %p190
      // Predicated region
      $region37: #{tpu_custom_call.1} parent=5 // pred_check
        _
      $region38: #{tpu_custom_call.1} parent=5 // pred_check_branch
        %193 = sbr.rel (%p190) target = $region40
      $region39: #{tpu_custom_call.1} parent=5 // pred_region
        %s194 = ssub.s32 %s14, 1
        %p195 = scmp.lt.s32.totalorder %s19, 1
        %s196 = scalar_select %p195, %s19, 1
        %s197 = smul.addr %s196, 4
        %s198 = scalar_lea.vmem %s0, %s197
        %p199 = pneg %p40
        %p200 = pneg %p37
        %p201 = pneg %p61
        %p202 = pneg %p58
        %p203 = pneg %p82
        %p204 = pneg %p79
        %p205 = pneg %p103
        %p206 = pneg %p100
        %p207 = pneg %p124
        %p208 = pneg %p121
        %p209 = pneg %p150
        %p210 = pneg %p147
        %s211 = sand.u32 %s137, 1
        %s212 = scalar_lea.sflag [#allocation5], %s211
        %s213 = sand.u32 %s137, 1
        %s214 = smul.addr %s213, 4
        %s215 = scalar_lea.vmem [#allocation4], %s214
        %p216 = scmp.lt.s32.totalorder %s19, 1
        %s217 = scalar_select %p216, %s19, 1
        %s218 = smul.addr %s217, 4
        %s219 = scalar_lea.vmem %s0, %s218
        %vm221 = vcmask 1024
        %222 = vst.msk [vmem:[#allocation2] sm:$0x3] %vm221, 0
        %vm223 = vcmask 140424
        %224 = vst.msk [vmem:[#allocation2] sm:$0x3] %vm223, 0
        %v225 = vld [vmem:[%s219] sm:$0xf]
        %v226 = vmax.f32 %v225, 0.0
        %v227 = vpack.c.bf16 %v226, %v226
        %v230 = vunpack.c.l.s4 1983009808
        %v231 = vunpack.c.0.s8 %v230
        %v232 = vlaneseq
        %v233 = vshrl.u32 %v232, 7
        %v234 = vsub.s32 %v231, %v233
        %v235 = vrot.slane %v227, %v234
        %236 = vrot.lane.b32.xlu0 %v235, 1
        %v237 = vpop.permute.xlu0 %236
        %vm239 = vcmask 132104
        %240 = vst.msk [vmem:[#allocation2] sm:$0x3] %vm239, %v237
        %v241 = vld [vmem:[#allocation2] sm:$0x3]
        %vm242 = vcmask 123904
        %243 = vst.msk [vmem:[#allocation3] sm:$0x3] %vm242, %v241
        %v244 = vld [vmem:[#allocation2] sm:$0x3]
        %v246 = vcombine.low %v244, %v244
        %v248 = vunpack.c.l.s4 1983009808
        %v249 = vunpack.c.0.s8 %v248
        %v250 = vlaneseq
        %v251 = vshrl.u32 %v250, 7
        %v252 = vsub.s32 %v249, %v251
        %v253 = vrot.slane %v246, %v252
        %254 = vrot.lane.b32.xlu0 %v253, 127
        %v255 = vpop.permute.xlu0 %254
        %vm257 = vcmask 125954
        %258 = vst.msk [vmem:[#allocation3] sm:$0xc] %vm257, %v255
        %v259 = vld [vmem:[#allocation2] sm:$0x3]
        %v262 = vunpack.c.l.s4 1983009808
        %v263 = vunpack.c.0.s8 %v262
        %v264 = vlaneseq
        %v265 = vshrl.u32 %v264, 7
        %v266 = vsub.s32 %v263, %v265
        %v267 = vrot.slane %v259, %v266
        %268 = vrot.lane.b32.xlu0 %v267, 126
        %v269 = vpop.permute.xlu0 %268
        %271 = vst.msk [vmem:[#allocation3 + $0x4] sm:$0x3] %vm242, %v269
        %v272 = vld [vmem:[%s1] sm:$0x3]
        %v273 = vld [vmem:[#allocation3] sm:$0xf]
        %v274 = vld [vmem:[#allocation3 + $0x4] sm:$0x3]
        %v275 = vld [vmem:[%s2] sm:$0xf]
        %277 = vset.pattern.permute.xlu0 0
        %278 = vperm.xlu0 %277, %v275
        %v279 = vpop.permute.xlu0 %278
        %v283 = vunpack.c.l.b16 %v273
        %v284 = vunpack.c.l.b16 %v274
        %v285 = vpack.c.b16 %v284, %v283
        %vm286 = vcmask 97280
        %v288 = vsel %vm286, %v272, 0
        %vm290 = vcmask 1045504
        %v292 = vsel %vm290, %v285, 0
        %294 = vmatprep.subr.bf16.mxu0 0
        %295 = vmatpush1.bf16.msra.mxu0 %v292
        %296 = vmatprep.subr.bf16.mxu0 0
        %297 = vmatpush1.bf16.msra.mxu0 0
        %298 = vmatprep.subr.bf16.mxu0 0
        %299 = vmatpush1.bf16.msra.mxu0 0
        %300 = vmatprep.subr.bf16.mxu0 0
        %301 = vmatpush1.bf16.msra.mxu0 0
        %302 = vmatprep.subr.bf16.mxu0 0
        %303 = vmatpush1.bf16.msra.mxu0 0
        %304 = vmatprep.subr.bf16.mxu0 0
        %305 = vmatpush1.bf16.msra.mxu0 0
        %306 = vmatprep.subr.bf16.mxu0 0
        %307 = vmatpush1.bf16.msra.mxu0 0
        %308 = vmatprep.subr.bf16.mxu0 0
        %309 = vmatpush1.bf16.msra.mxu0 0
        %310 = vmatprep.subr.bf16.mxu0 0
        %311 = vmatpush1.bf16.msra.mxu0 0
        %312 = vmatprep.subr.bf16.mxu0 0
        %313 = vmatpush1.bf16.msra.mxu0 0
        %314 = vmatprep.subr.bf16.mxu0 0
        %315 = vmatpush1.bf16.msra.mxu0 0
        %316 = vmatprep.subr.bf16.mxu0 0
        %317 = vmatpush1.bf16.msra.mxu0 0
        %318 = vmatprep.subr.bf16.mxu0 0
        %319 = vmatpush1.bf16.msra.mxu0 0
        %320 = vmatprep.subr.bf16.mxu0 0
        %321 = vmatpush1.bf16.msra.mxu0 0
        %322 = vmatprep.subr.bf16.mxu0 0
        %323 = vmatpush1.bf16.msra.mxu0 0
        %324 = vmatprep.subr.bf16.mxu0 0
        %325 = vmatpush1.bf16.msra.mxu0 0
        %326 = vmatprep.mubr.bf16.mxu0 0
        %327 = vmatmul.mubr.bf16.gmra.mrb[0].mxu0 %v288
        %v328 = vpop.f32.mrb[0].mxu0
        %v329 = vadd.f32 %v279, %v328
        %v330 = vpop.f32.mrb[0].mxu0
        %v331 = vpop.f32.mrb[0].mxu0
        %v332 = vpop.f32.mrb[0].mxu0
        %333 = vdwg.mxu0
        %v334 = vmax.f32 %v329, 0.0
        %v335 = vpack.c.bf16 %v334, %v334
        %v338 = vunpack.c.l.s4 1983009808
        %v339 = vunpack.c.0.s8 %v338
        %v340 = vlaneseq
        %v341 = vshrl.u32 %v340, 7
        %v342 = vsub.s32 %v339, %v341
        %v343 = vrot.slane %v335, %v342
        %344 = vrot.lane.b32.xlu0 %v343, 1
        %v345 = vpop.permute.xlu0 %344
        %347 = vst.msk [vmem:[#allocation2] sm:$0x3] %vm239, %v345
        %v348 = vld [vmem:[#allocation2] sm:$0x3]
        %349 = vst.msk [vmem:[#allocation3] sm:$0x3] %vm242, %v348
        %v350 = vld [vmem:[#allocation2] sm:$0x3]
        %v352 = vcombine.low %v350, %v350
        %v354 = vunpack.c.l.s4 1983009808
        %v355 = vunpack.c.0.s8 %v354
        %v356 = vlaneseq
        %v357 = vshrl.u32 %v356, 7
        %v358 = vsub.s32 %v355, %v357
        %v359 = vrot.slane %v352, %v358
        %360 = vrot.lane.b32.xlu0 %v359, 127
        %v361 = vpop.permute.xlu0 %360
        %363 = vst.msk [vmem:[#allocation3] sm:$0xc] %vm257, %v361
        %v364 = vld [vmem:[#allocation2] sm:$0x3]
        %v367 = vunpack.c.l.s4 1983009808
        %v368 = vunpack.c.0.s8 %v367
        %v369 = vlaneseq
        %v370 = vshrl.u32 %v369, 7
        %v371 = vsub.s32 %v368, %v370
        %v372 = vrot.slane %v364, %v371
        %373 = vrot.lane.b32.xlu0 %v372, 126
        %v374 = vpop.permute.xlu0 %373
        %376 = vst.msk [vmem:[#allocation3 + $0x4] sm:$0x3] %vm242, %v374
        %v377 = vld [vmem:[%s3] sm:$0x3]
        %v378 = vld [vmem:[#allocation3] sm:$0xf]
        %v379 = vld [vmem:[#allocation3 + $0x4] sm:$0x3]
        %v380 = vld [vmem:[%s4] sm:$0xf]
        %382 = vset.pattern.permute.xlu0 0
        %383 = vperm.xlu0 %382, %v380
        %v384 = vpop.permute.xlu0 %383
        %v388 = vunpack.c.l.b16 %v378
        %v389 = vunpack.c.l.b16 %v379
        %v390 = vpack.c.b16 %v389, %v388
        %v392 = vsel %vm286, %v377, 0
        %v395 = vsel %vm290, %v390, 0
        %397 = vmatprep.subr.bf16.mxu0 0
        %398 = vmatpush1.bf16.msra.mxu0 %v395
        %399 = vmatprep.subr.bf16.mxu0 0
        %400 = vmatpush1.bf16.msra.mxu0 0
        %401 = vmatprep.subr.bf16.mxu0 0
        %402 = vmatpush1.bf16.msra.mxu0 0
        %403 = vmatprep.subr.bf16.mxu0 0
        %404 = vmatpush1.bf16.msra.mxu0 0
        %405 = vmatprep.subr.bf16.mxu0 0
        %406 = vmatpush1.bf16.msra.mxu0 0
        %407 = vmatprep.subr.bf16.mxu0 0
        %408 = vmatpush1.bf16.msra.mxu0 0
        %409 = vmatprep.subr.bf16.mxu0 0
        %410 = vmatpush1.bf16.msra.mxu0 0
        %411 = vmatprep.subr.bf16.mxu0 0
        %412 = vmatpush1.bf16.msra.mxu0 0
        %413 = vmatprep.subr.bf16.mxu0 0
        %414 = vmatpush1.bf16.msra.mxu0 0
        %415 = vmatprep.subr.bf16.mxu0 0
        %416 = vmatpush1.bf16.msra.mxu0 0
        %417 = vmatprep.subr.bf16.mxu0 0
        %418 = vmatpush1.bf16.msra.mxu0 0
        %419 = vmatprep.subr.bf16.mxu0 0
        %420 = vmatpush1.bf16.msra.mxu0 0
        %421 = vmatprep.subr.bf16.mxu0 0
        %422 = vmatpush1.bf16.msra.mxu0 0
        %423 = vmatprep.subr.bf16.mxu0 0
        %424 = vmatpush1.bf16.msra.mxu0 0
        %425 = vmatprep.subr.bf16.mxu0 0
        %426 = vmatpush1.bf16.msra.mxu0 0
        %427 = vmatprep.subr.bf16.mxu0 0
        %428 = vmatpush1.bf16.msra.mxu0 0
        %429 = vmatprep.mubr.bf16.mxu0 0
        %430 = vmatmul.mubr.bf16.gmra.mrb[0].mxu0 %v392
        %v431 = vpop.f32.mrb[0].mxu0
        %v432 = vadd.f32 %v384, %v431
        %v433 = vpop.f32.mrb[0].mxu0
        %v434 = vpop.f32.mrb[0].mxu0
        %v435 = vpop.f32.mrb[0].mxu0
        %436 = vdwg.mxu0
        %v437 = vld [vmem:[%s219] sm:$0xf]
        %v438 = vadd.f32 %v432, %v437
        %vm439 = vcmask 125952
        %440 = vst.msk [vmem:[%s215] sm:$0xf] %vm439, %v438
        %s441 = sand.u32 %s137, 1
        %s442 = scalar_lea.sflag [#allocation5], %s441
        %s443 = sand.u32 %s137, 1
        %s444 = smul.addr %s443, 4
        %s445 = scalar_lea.vmem [#allocation4], %s444
        // Predicated region
        $region41: #{tpu_custom_call.1} parent=39 // pred_check
          %p446 = pneg %p147
        $region42: #{tpu_custom_call.1} parent=39 // pred_check_branch
          %448 = sbr.rel (%p446) target = $region44
        $region43: #{tpu_custom_call.1} parent=39 // pred_region
          %s450 = ssub.s32 64, 64
          %451 = vsyncadd %s442, %s450
          %s452 = smul.addr %s19, 64
          %s453 = scalar_lea.hbm %s5, %s452
          %s455 = sshll.u32 %s445, 4
          %s456 = int_to_ptr.vmem [resolvable:$true] %s455
          %458 = dma.vmem_to_hbm [thread:$0]  %s456, 64, %s453, %s442
        $region44: #{tpu_custom_call.1} parent=39 // pred_fallthru
          _
      $region40: #{tpu_custom_call.1} parent=5 // pred_fallthru
        _
      %p459 = scmp.le.s32.totalorder 2, %s14
      // Predicated region
      $region45: #{tpu_custom_call.1} parent=5 // pred_check
        %p460 = pneg %p459
      $region46: #{tpu_custom_call.1} parent=5 // pred_check_branch
        %462 = sbr.rel (%p460) target = $region48
      $region47: #{tpu_custom_call.1} parent=5 // pred_region
        %s463 = ssub.s32 %s14, 2
        // Predicated region
        $region49: #{tpu_custom_call.1} parent=47 // pred_check
          %p464 = pneg %p153
        $region50: #{tpu_custom_call.1} parent=47 // pred_check_branch
          %466 = sbr.rel (%p464) target = $region52
        $region51: #{tpu_custom_call.1} parent=47 // pred_region
          %s467 = sand.u32 %s138, 1
          %s468 = scalar_lea.sflag [#allocation5], %s467
          %s469 = sand.u32 %s138, 1
          %s470 = smul.addr %s469, 4
          %s471 = scalar_lea.vmem [#allocation4], %s470
          %472 = dma.done %s468, 64
        $region52: #{tpu_custom_call.1} parent=47 // pred_fallthru
          _
      $region48: #{tpu_custom_call.1} parent=5 // pred_fallthru
        _
    $region6: #{tpu_custom_call.1} parent=1 // loop_footer
      %s18 = sadd.s32 1, %s14
    $region7: #{tpu_custom_call.1} parent=1 // loop_footer_branch
      %13 = sbr.rel target = $region3
    $region8: #{tpu_custom_call.1} parent=1 // loop_exit
      _
    %473 = vsyncpa [#allocation5], 1
    %s474 = scalar_lea.sflag [#allocation5], 1
    %475 = vsyncpa %s474, 1

// kernel: tpu_custom_call.1
$region0: #{tpu_custom_call.1}
  #allocation0 [shape = 'u32[]', space=smem, size = 0x4, offset = 0x4, fixed_abs, tag = 'smem constant byte address 0x4 - core index']
  #allocation1 [shape = 'u32[144,128]{1,0:T(1,128)}', space=vmem, size = 0x12000, scoped, tag = 'internal scratch']
  #allocation2 [shape = 'bf16[4,18]{1,0:T(4,128)(2,1)}', space=vmem, size = 0x400, scoped, tag = 'scratch operand']
  #allocation3 [shape = 'bf16[12,16]{1,0:T(8,128)(2,1)}', space=vmem, size = 0x1000, scoped, tag = 'scratch operand']
  %s0 = inlined_call_operand.vmem [shape: f32[2,4,16], index: 0, kind: input, shape index: {}]
  %s1 = inlined_call_operand.vmem [shape: bf16[4,12], index: 1, kind: input, shape index: {}]
  %s2 = inlined_call_operand.vmem [shape: f32[4,1], index: 2, kind: input, shape index: {}]
  %s3 = inlined_call_operand.vmem [shape: bf16[4,12], index: 3, kind: input, shape index: {}]
  %s4 = inlined_call_operand.vmem [shape: f32[4,1], index: 4, kind: input, shape index: {}]
  %s5 = inlined_call_operand.hbm [shape: f32[2,4,16], index: 5, kind: output, shape index: {}]
  %s6 = sld [smem:[#allocation0]]
  $region53: #{tpu_custom_call.1} parent=0
    _
  %s8 = ssub.s32 1, %s6
  %s9 = scalar_select 0, %s8, %s6
  $region1: #{tpu_custom_call.1} parent=0
    #allocation4 [shape = 'u8[4096]{0}', space=vmem, size = 0x1000, scoped, tag = 'output window, operand 0']
    #allocation5 [shape = 's32[2]{0}', space=sflag, size = 0x8, scoped, tag = 'scoped memory for tpu_custom_call.1']
    %10 = vsyncpa [#allocation5], 0
    %s11 = scalar_lea.sflag [#allocation5], 1
    %12 = vsyncpa %s11, 0
    loop: start=0, step=1, limit=4
    $region2: #{tpu_custom_call.1} parent=1 // loop_pre_header
      _
    $region3: #{tpu_custom_call.1} parent=1 // loop_header
      %s14 = sphi 0, %s18
      %p15 = scmp.ge.s32.totalorder %s14, 4
      %s24 = sphi 0, %s26
      %s27 = sphi 0, %s24
      %s28 = sphi 0, %s27
      %s44 = sphi 0, %s28
      %s48 = sphi 0, %s48
      %s50 = sphi 0, %s48
      %s51 = sphi 0, %s50
      %s65 = sphi 0, %s51
      %s69 = sphi 0, %s69
      %s71 = sphi 0, %s69
      %s72 = sphi 0, %s71
      %s86 = sphi 0, %s72
      %s90 = sphi 0, %s90
      %s92 = sphi 0, %s90
      %s93 = sphi 0, %s92
      %s107 = sphi 0, %s93
      %s111 = sphi 0, %s111
      %s113 = sphi 0, %s111
      %s114 = sphi 0, %s113
      %s128 = sphi 0, %s114
      %s134 = sphi 0, %s136
      %s137 = sphi 0, %s134
      %s138 = sphi 0, %s137
      %s154 = sphi 0, %s138
    $region4: #{tpu_custom_call.1} parent=1 // loop_header_branch
      %17 = sbr.rel (%p15) target = $region8
    $region5: #{tpu_custom_call.1} parent=1 // loop_body
      %s19 = ssub.s32 %s14, 1
      %s20 = ssub.s32 %s14, 2
      %s21 = sadd.s32 %s14, 1
      %s22 = ssub.s32 %s14, %s21
      %p23 = scmp.eq.s32.totalorder %s22, 0
      %s25 = sadd.s32 %s24, 1
      %s26 = scalar_select %p23, %s24, %s25
      %p29 = pneg %p23
      %p30 = scmp.eq.s32.totalorder %s14, 1
      %p31 = por %p29, %p30
      %p32 = scmp.ne.s32.totalorder %s24, %s27
      %p33 = scmp.eq.s32.totalorder %s14, 0
      %p34 = por %p32, %p33
      %p35 = scmp.ne.s32.totalorder %s24, %s27
      %p36 = scmp.eq.s32.totalorder %s19, 1
      %p37 = por %p35, %p36
      %p38 = scmp.ne.s32.totalorder %s27, %s28
      %p39 = scmp.eq.s32.totalorder %s19, 0
      %p40 = por %p38, %p39
      %p41 = scmp.ne.s32.totalorder %s27, %s28
      %p42 = scmp.eq.s32.totalorder %s20, 1
      %p43 = por %p41, %p42
      %p45 = scmp.ne.s32.totalorder %s28, %s44
      %p46 = scmp.eq.s32.totalorder %s20, 0
      %p47 = por %p45, %p46
      %s49 = sadd.s32 %s48, 1
      %p52 = scmp.eq.s32.totalorder %s14, 1
      %p53 = scmp.ne.s32.totalorder %s48, %s50
      %p54 = scmp.eq.s32.totalorder %s14, 0
      %p55 = por %p53, %p54
      %p56 = scmp.ne.s32.totalorder %s48, %s50
      %p57 = scmp.eq.s32.totalorder %s19, 1
      %p58 = por %p56, %p57
      %p59 = scmp.ne.s32.totalorder %s50, %s51
      %p60 = scmp.eq.s32.totalorder %s19, 0
      %p61 = por %p59, %p60
      %p62 = scmp.ne.s32.totalorder %s50, %s51
      %p63 = scmp.eq.s32.totalorder %s20, 1
      %p64 = por %p62, %p63
      %p66 = scmp.ne.s32.totalorder %s51, %s65
      %p67 = scmp.eq.s32.totalorder %s20, 0
      %p68 = por %p66, %p67
      %s70 = sadd.s32 %s69, 1
      %p73 = scmp.eq.s32.totalorder %s14, 1
      %p74 = scmp.ne.s32.totalorder %s69, %s71
      %p75 = scmp.eq.s32.totalorder %s14, 0
      %p76 = por %p74, %p75
      %p77 = scmp.ne.s32.totalorder %s69, %s71
      %p78 = scmp.eq.s32.totalorder %s19, 1
      %p79 = por %p77, %p78
      %p80 = scmp.ne.s32.totalorder %s71, %s72
      %p81 = scmp.eq.s32.totalorder %s19, 0
      %p82 = por %p80, %p81
      %p83 = scmp.ne.s32.totalorder %s71, %s72
      %p84 = scmp.eq.s32.totalorder %s20, 1
      %p85 = por %p83, %p84
      %p87 = scmp.ne.s32.totalorder %s72, %s86
      %p88 = scmp.eq.s32.totalorder %s20, 0
      %p89 = por %p87, %p88
      %s91 = sadd.s32 %s90, 1
      %p94 = scmp.eq.s32.totalorder %s14, 1
      %p95 = scmp.ne.s32.totalorder %s90, %s92
      %p96 = scmp.eq.s32.totalorder %s14, 0
      %p97 = por %p95, %p96
      %p98 = scmp.ne.s32.totalorder %s90, %s92
      %p99 = scmp.eq.s32.totalorder %s19, 1
      %p100 = por %p98, %p99
      %p101 = scmp.ne.s32.totalorder %s92, %s93
      %p102 = scmp.eq.s32.totalorder %s19, 0
      %p103 = por %p101, %p102
      %p104 = scmp.ne.s32.totalorder %s92, %s93
      %p105 = scmp.eq.s32.totalorder %s20, 1
      %p106 = por %p104, %p105
      %p108 = scmp.ne.s32.totalorder %s93, %s107
      %p109 = scmp.eq.s32.totalorder %s20, 0
      %p110 = por %p108, %p109
      %s112 = sadd.s32 %s111, 1
      %p115 = scmp.eq.s32.totalorder %s14, 1
      %p116 = scmp.ne.s32.totalorder %s111, %s113
      %p117 = scmp.eq.s32.totalorder %s14, 0
      %p118 = por %p116, %p117
      %p119 = scmp.ne.s32.totalorder %s111, %s113
      %p120 = scmp.eq.s32.totalorder %s19, 1
      %p121 = por %p119, %p120
      %p122 = scmp.ne.s32.totalorder %s113, %s114
      %p123 = scmp.eq.s32.totalorder %s19, 0
      %p124 = por %p122, %p123
      %p125 = scmp.ne.s32.totalorder %s113, %s114
      %p126 = scmp.eq.s32.totalorder %s20, 1
      %p127 = por %p125, %p126
      %p129 = scmp.ne.s32.totalorder %s114, %s128
      %p130 = scmp.eq.s32.totalorder %s20, 0
      %p131 = por %p129, %p130
      %s132 = ssub.s32 %s14, %s21
      %p133 = scmp.eq.s32.totalorder %s132, 0
      %s135 = sadd.s32 %s134, 1
      %s136 = scalar_select %p133, %s134, %s135
      %p139 = pneg %p133
      %p140 = scmp.eq.s32.totalorder %s14, 1
      %p141 = por %p139, %p140
      %p142 = scmp.ne.s32.totalorder %s134, %s137
      %p143 = scmp.eq.s32.totalorder %s14, 0
      %p144 = por %p142, %p143
      %p145 = scmp.ne.s32.totalorder %s134, %s137
      %p146 = scmp.eq.s32.totalorder %s19, 1
      %p147 = por %p145, %p146
      %p148 = scmp.ne.s32.totalorder %s137, %s138
      %p149 = scmp.eq.s32.totalorder %s19, 0
      %p150 = por %p148, %p149
      %p151 = scmp.ne.s32.totalorder %s137, %s138
      %p152 = scmp.eq.s32.totalorder %s20, 1
      %p153 = por %p151, %p152
      %p155 = scmp.ne.s32.totalorder %s138, %s154
      %p156 = scmp.eq.s32.totalorder %s20, 0
      %p157 = por %p155, %p156
      %p158 = scmp.le.s32.totalorder 1, %s14
      %p159 = scmp.lt.s32.totalorder %s14, 3
      %p160 = pnand %p158, %p159
      %p161 = pneg %p160
      // Predicated region
      $region9: #{tpu_custom_call.1} parent=5 // pred_check
        _
      $region10: #{tpu_custom_call.1} parent=5 // pred_check_branch
        %163 = sbr.rel (%p160) target = $region12
      $region11: #{tpu_custom_call.1} parent=5 // pred_region
        %s164 = ssub.s32 %s14, 1
        // Predicated region
        $region13: #{tpu_custom_call.1} parent=11 // pred_check
          %p165 = pneg %p61
        $region14: #{tpu_custom_call.1} parent=11 // pred_check_branch
          %167 = sbr.rel (%p165) target = $region16
        $region15: #{tpu_custom_call.1} parent=11 // pred_region
          _
        $region16: #{tpu_custom_call.1} parent=11 // pred_fallthru
          _
        // Predicated region
        $region17: #{tpu_custom_call.1} parent=11 // pred_check
          %p168 = pneg %p82
        $region18: #{tpu_custom_call.1} parent=11 // pred_check_branch
          %170 = sbr.rel (%p168) target = $region20
        $region19: #{tpu_custom_call.1} parent=11 // pred_region
          _
        $region20: #{tpu_custom_call.1} parent=11 // pred_fallthru
          _
        // Predicated region
        $region21: #{tpu_custom_call.1} parent=11 // pred_check
          %p171 = pneg %p103
        $region22: #{tpu_custom_call.1} parent=11 // pred_check_branch
          %173 = sbr.rel (%p171) target = $region24
        $region23: #{tpu_custom_call.1} parent=11 // pred_region
          _
        $region24: #{tpu_custom_call.1} parent=11 // pred_fallthru
          _
        // Predicated region
        $region25: #{tpu_custom_call.1} parent=11 // pred_check
          %p174 = pneg %p124
        $region26: #{tpu_custom_call.1} parent=11 // pred_check_branch
          %176 = sbr.rel (%p174) target = $region28
        $region27: #{tpu_custom_call.1} parent=11 // pred_region
          _
        $region28: #{tpu_custom_call.1} parent=11 // pred_fallthru
          _
      $region12: #{tpu_custom_call.1} parent=5 // pred_fallthru
        _
      %p177 = scmp.lt.s32.totalorder %s14, 2
      // Predicated region
      $region29: #{tpu_custom_call.1} parent=5 // pred_check
        %p178 = pneg %p177
      $region30: #{tpu_custom_call.1} parent=5 // pred_check_branch
        %180 = sbr.rel (%p178) target = $region32
      $region31: #{tpu_custom_call.1} parent=5 // pred_region
        // Predicated region
        $region33: #{tpu_custom_call.1} parent=31 // pred_check
          %p181 = pneg %p34
        $region34: #{tpu_custom_call.1} parent=31 // pred_check_branch
          %183 = sbr.rel (%p181) target = $region36
        $region35: #{tpu_custom_call.1} parent=31 // pred_region
          %p184 = scmp.lt.s32.totalorder %s14, 1
          %s185 = scalar_select %p184, %s14, 1
          %s186 = smul.addr %s185, 4
          %s187 = scalar_lea.vmem %s0, %s186
        $region36: #{tpu_custom_call.1} parent=31 // pred_fallthru
          _
      $region32: #{tpu_custom_call.1} parent=5 // pred_fallthru
        _
      %p188 = scmp.le.s32.totalorder 1, %s14
      %p189 = scmp.lt.s32.totalorder %s14, 3
      %p190 = pnand %p188, %p189
      %p191 = pneg %p190
      // Predicated region
      $region37: #{tpu_custom_call.1} parent=5 // pred_check
        _
      $region38: #{tpu_custom_call.1} parent=5 // pred_check_branch
        %193 = sbr.rel (%p190) target = $region40
      $region39: #{tpu_custom_call.1} parent=5 // pred_region
        %s194 = ssub.s32 %s14, 1
        %p195 = scmp.lt.s32.totalorder %s19, 1
        %s196 = scalar_select %p195, %s19, 1
        %s197 = smul.addr %s196, 4
        %s198 = scalar_lea.vmem %s0, %s197
        %p199 = pneg %p40
        %p200 = pneg %p37
        %p201 = pneg %p61
        %p202 = pneg %p58
        %p203 = pneg %p82
        %p204 = pneg %p79
        %p205 = pneg %p103
        %p206 = pneg %p100
        %p207 = pneg %p124
        %p208 = pneg %p121
        %p209 = pneg %p150
        %p210 = pneg %p147
        %s211 = sand.u32 %s137, 1
        %s212 = scalar_lea.sflag [#allocation5], %s211
        %s213 = sand.u32 %s137, 1
        %s214 = smul.addr %s213, 4
        %s215 = scalar_lea.vmem [#allocation4], %s214
        %p216 = scmp.lt.s32.totalorder %s19, 1
        %s217 = scalar_select %p216, %s19, 1
        %s218 = smul.addr %s217, 4
        %s219 = scalar_lea.vmem %s0, %s218
        %vm221 = vcmask 1024
        %222 = vst.msk [vmem:[#allocation2] sm:$0x3] %vm221, 0
        %vm223 = vcmask 140424
        %224 = vst.msk [vmem:[#allocation2] sm:$0x3] %vm223, 0
        %v225 = vld [vmem:[%s219] sm:$0xf]
        %v226 = vmax.f32 %v225, 0.0
        %v227 = vpack.c.bf16 %v226, %v226
        %v230 = vunpack.c.l.s4 1983009808
        %v231 = vunpack.c.0.s8 %v230
        %v232 = vlaneseq
        %v233 = vshrl.u32 %v232, 7
        %v234 = vsub.s32 %v231, %v233
        %v235 = vrot.slane %v227, %v234
        %236 = vrot.lane.b32.xlu0 %v235, 1
        %v237 = vpop.permute.xlu0 %236
        %vm239 = vcmask 132104
        %240 = vst.msk [vmem:[#allocation2] sm:$0x3] %vm239, %v237
        %v241 = vld [vmem:[#allocation2] sm:$0x3]
        %vm242 = vcmask 123904
        %243 = vst.msk [vmem:[#allocation3] sm:$0x3] %vm242, %v241
        %v244 = vld [vmem:[#allocation2] sm:$0x3]
        %v246 = vcombine.low %v244, %v244
        %v248 = vunpack.c.l.s4 1983009808
        %v249 = vunpack.c.0.s8 %v248
        %v250 = vlaneseq
        %v251 = vshrl.u32 %v250, 7
        %v252 = vsub.s32 %v249, %v251
        %v253 = vrot.slane %v246, %v252
        %254 = vrot.lane.b32.xlu0 %v253, 127
        %v255 = vpop.permute.xlu0 %254
        %vm257 = vcmask 125954
        %258 = vst.msk [vmem:[#allocation3] sm:$0xc] %vm257, %v255
        %v259 = vld [vmem:[#allocation2] sm:$0x3]
        %v262 = vunpack.c.l.s4 1983009808
        %v263 = vunpack.c.0.s8 %v262
        %v264 = vlaneseq
        %v265 = vshrl.u32 %v264, 7
        %v266 = vsub.s32 %v263, %v265
        %v267 = vrot.slane %v259, %v266
        %268 = vrot.lane.b32.xlu0 %v267, 126
        %v269 = vpop.permute.xlu0 %268
        %271 = vst.msk [vmem:[#allocation3 + $0x4] sm:$0x3] %vm242, %v269
        %v272 = vld [vmem:[%s1] sm:$0x3]
        %v273 = vld [vmem:[#allocation3] sm:$0xf]
        %v274 = vld [vmem:[#allocation3 + $0x4] sm:$0x3]
        %v275 = vld [vmem:[%s2] sm:$0xf]
        %277 = vset.pattern.permute.xlu0 0
        %278 = vperm.xlu0 %277, %v275
        %v279 = vpop.permute.xlu0 %278
        %v283 = vunpack.c.l.b16 %v273
        %v284 = vunpack.c.l.b16 %v274
        %v285 = vpack.c.b16 %v284, %v283
        %vm286 = vcmask 97280
        %v288 = vsel %vm286, %v272, 0
        %vm290 = vcmask 1045504
        %v292 = vsel %vm290, %v285, 0
        %294 = vmatprep.subr.bf16.mxu0 0
        %295 = vmatpush1.bf16.msra.mxu0 %v292
        %296 = vmatprep.subr.bf16.mxu0 0
        %297 = vmatpush1.bf16.msra.mxu0 0
        %298 = vmatprep.subr.bf16.mxu0 0
        %299 = vmatpush1.bf16.msra.mxu0 0
        %300 = vmatprep.subr.bf16.mxu0 0
        %301 = vmatpush1.bf16.msra.mxu0 0
        %302 = vmatprep.subr.bf16.mxu0 0
        %303 = vmatpush1.bf16.msra.mxu0 0
        %304 = vmatprep.subr.bf16.mxu0 0
        %305 = vmatpush1.bf16.msra.mxu0 0
        %306 = vmatprep.subr.bf16.mxu0 0
        %307 = vmatpush1.bf16.msra.mxu0 0
        %308 = vmatprep.subr.bf16.mxu0 0
        %309 = vmatpush1.bf16.msra.mxu0 0
        %310 = vmatprep.subr.bf16.mxu0 0
        %311 = vmatpush1.bf16.msra.mxu0 0
        %312 = vmatprep.subr.bf16.mxu0 0
        %313 = vmatpush1.bf16.msra.mxu0 0
        %314 = vmatprep.subr.bf16.mxu0 0
        %315 = vmatpush1.bf16.msra.mxu0 0
        %316 = vmatprep.subr.bf16.mxu0 0
        %317 = vmatpush1.bf16.msra.mxu0 0
        %318 = vmatprep.subr.bf16.mxu0 0
        %319 = vmatpush1.bf16.msra.mxu0 0
        %320 = vmatprep.subr.bf16.mxu0 0
        %321 = vmatpush1.bf16.msra.mxu0 0
        %322 = vmatprep.subr.bf16.mxu0 0
        %323 = vmatpush1.bf16.msra.mxu0 0
        %324 = vmatprep.subr.bf16.mxu0 0
        %325 = vmatpush1.bf16.msra.mxu0 0
        %326 = vmatprep.mubr.bf16.mxu0 0
        %327 = vmatmul.mubr.bf16.gmra.mrb[0].mxu0 %v288
        %v328 = vpop.f32.mrb[0].mxu0
        %v329 = vadd.f32 %v279, %v328
        %v330 = vpop.f32.mrb[0].mxu0
        %v331 = vpop.f32.mrb[0].mxu0
        %v332 = vpop.f32.mrb[0].mxu0
        %333 = vdwg.mxu0
        %v334 = vmax.f32 %v329, 0.0
        %v335 = vpack.c.bf16 %v334, %v334
        %v338 = vunpack.c.l.s4 1983009808
        %v339 = vunpack.c.0.s8 %v338
        %v340 = vlaneseq
        %v341 = vshrl.u32 %v340, 7
        %v342 = vsub.s32 %v339, %v341
        %v343 = vrot.slane %v335, %v342
        %344 = vrot.lane.b32.xlu0 %v343, 1
        %v345 = vpop.permute.xlu0 %344
        %347 = vst.msk [vmem:[#allocation2] sm:$0x3] %vm239, %v345
        %v348 = vld [vmem:[#allocation2] sm:$0x3]
        %349 = vst.msk [vmem:[#allocation3] sm:$0x3] %vm242, %v348
        %v350 = vld [vmem:[#allocation2] sm:$0x3]
        %v352 = vcombine.low %v350, %v350
        %v354 = vunpack.c.l.s4 1983009808
        %v355 = vunpack.c.0.s8 %v354
        %v356 = vlaneseq
        %v357 = vshrl.u32 %v356, 7
        %v358 = vsub.s32 %v355, %v357
        %v359 = vrot.slane %v352, %v358
        %360 = vrot.lane.b32.xlu0 %v359, 127
        %v361 = vpop.permute.xlu0 %360
        %363 = vst.msk [vmem:[#allocation3] sm:$0xc] %vm257, %v361
        %v364 = vld [vmem:[#allocation2] sm:$0x3]
        %v367 = vunpack.c.l.s4 1983009808
        %v368 = vunpack.c.0.s8 %v367
        %v369 = vlaneseq
        %v370 = vshrl.u32 %v369, 7
        %v371 = vsub.s32 %v368, %v370
        %v372 = vrot.slane %v364, %v371
        %373 = vrot.lane.b32.xlu0 %v372, 126
        %v374 = vpop.permute.xlu0 %373
        %376 = vst.msk [vmem:[#allocation3 + $0x4] sm:$0x3] %vm242, %v374
        %v377 = vld [vmem:[%s3] sm:$0x3]
        %v378 = vld [vmem:[#allocation3] sm:$0xf]
        %v379 = vld [vmem:[#allocation3 + $0x4] sm:$0x3]
        %v380 = vld [vmem:[%s4] sm:$0xf]
        %382 = vset.pattern.permute.xlu0 0
        %383 = vperm.xlu0 %382, %v380
        %v384 = vpop.permute.xlu0 %383
        %v388 = vunpack.c.l.b16 %v378
        %v389 = vunpack.c.l.b16 %v379
        %v390 = vpack.c.b16 %v389, %v388
        %v392 = vsel %vm286, %v377, 0
        %v395 = vsel %vm290, %v390, 0
        %397 = vmatprep.subr.bf16.mxu0 0
        %398 = vmatpush1.bf16.msra.mxu0 %v395
        %399 = vmatprep.subr.bf16.mxu0 0
        %400 = vmatpush1.bf16.msra.mxu0 0
        %401 = vmatprep.subr.bf16.mxu0 0
        %402 = vmatpush1.bf16.msra.mxu0 0
        %403 = vmatprep.subr.bf16.mxu0 0
        %404 = vmatpush1.bf16.msra.mxu0 0
        %405 = vmatprep.subr.bf16.mxu0 0
        %406 = vmatpush1.bf16.msra.mxu0 0
        %407 = vmatprep.subr.bf16.mxu0 0
        %408 = vmatpush1.bf16.msra.mxu0 0
        %409 = vmatprep.subr.bf16.mxu0 0
        %410 = vmatpush1.bf16.msra.mxu0 0
        %411 = vmatprep.subr.bf16.mxu0 0
        %412 = vmatpush1.bf16.msra.mxu0 0
        %413 = vmatprep.subr.bf16.mxu0 0
        %414 = vmatpush1.bf16.msra.mxu0 0
        %415 = vmatprep.subr.bf16.mxu0 0
        %416 = vmatpush1.bf16.msra.mxu0 0
        %417 = vmatprep.subr.bf16.mxu0 0
        %418 = vmatpush1.bf16.msra.mxu0 0
        %419 = vmatprep.subr.bf16.mxu0 0
        %420 = vmatpush1.bf16.msra.mxu0 0
        %421 = vmatprep.subr.bf16.mxu0 0
        %422 = vmatpush1.bf16.msra.mxu0 0
        %423 = vmatprep.subr.bf16.mxu0 0
        %424 = vmatpush1.bf16.msra.mxu0 0
        %425 = vmatprep.subr.bf16.mxu0 0
        %426 = vmatpush1.bf16.msra.mxu0 0
        %427 = vmatprep.subr.bf16.mxu0 0
        %428 = vmatpush1.bf16.msra.mxu0 0
        %429 = vmatprep.mubr.bf16.mxu0 0
        %430 = vmatmul.mubr.bf16.gmra.mrb[0].mxu0 %v392
        %v431 = vpop.f32.mrb[0].mxu0
        %v432 = vadd.f32 %v384, %v431
        %v433 = vpop.f32.mrb[0].mxu0
        %v434 = vpop.f32.mrb[0].mxu0
        %v435 = vpop.f32.mrb[0].mxu0
        %436 = vdwg.mxu0
        %v437 = vld [vmem:[%s219] sm:$0xf]
        %v438 = vadd.f32 %v432, %v437
        %vm439 = vcmask 125952
        %440 = vst.msk [vmem:[%s215] sm:$0xf] %vm439, %v438
        %s441 = sand.u32 %s137, 1
        %s442 = scalar_lea.sflag [#allocation5], %s441
        %s443 = sand.u32 %s137, 1
        %s444 = smul.addr %s443, 4
        %s445 = scalar_lea.vmem [#allocation4], %s444
        // Predicated region
        $region41: #{tpu_custom_call.1} parent=39 // pred_check
          %p446 = pneg %p147
        $region42: #{tpu_custom_call.1} parent=39 // pred_check_branch
          %448 = sbr.rel (%p446) target = $region44
        $region43: #{tpu_custom_call.1} parent=39 // pred_region
          %s450 = ssub.s32 64, 64
          %451 = vsyncadd %s442, %s450
          %s452 = smul.addr %s19, 64
          %s453 = scalar_lea.hbm %s5, %s452
          %s455 = sshll.u32 %s445, 4
          %s456 = int_to_ptr.vmem [resolvable:$true] %s455
          %458 = dma.vmem_to_hbm [thread:$0]  %s456, 64, %s453, %s442
        $region44: #{tpu_custom_call.1} parent=39 // pred_fallthru
          _
      $region40: #{tpu_custom_call.1} parent=5 // pred_fallthru
        _
      %p459 = scmp.le.s32.totalorder 2, %s14
      // Predicated region
      $region45: #{tpu_custom_call.1} parent=5 // pred_check
        %p460 = pneg %p459
      $region46: #{tpu_custom_call.1} parent=5 // pred_check_branch
        %462 = sbr.rel (%p460) target = $region48
      $region47: #{tpu_custom_call.1} parent=5 // pred_region
        %s463 = ssub.s32 %s14, 2
        // Predicated region
        $region49: #{tpu_custom_call.1} parent=47 // pred_check
          %p464 = pneg %p153
        $region50: #{tpu_custom_call.1} parent=47 // pred_check_branch
          %466 = sbr.rel (%p464) target = $region52
        $region51: #{tpu_custom_call.1} parent=47 // pred_region
          %s467 = sand.u32 %s138, 1
          %s468 = scalar_lea.sflag [#allocation5], %s467
          %s469 = sand.u32 %s138, 1
          %s470 = smul.addr %s469, 4
          %s471 = scalar_lea.vmem [#allocation4], %s470
          %472 = dma.done %s468, 64
        $region52: #{tpu_custom_call.1} parent=47 // pred_fallthru
          _
      $region48: #{tpu_custom_call.1} parent=5 // pred_fallthru
        _
    $region6: #{tpu_custom_call.1} parent=1 // loop_footer
      %s18 = sadd.s32 1, %s14
    $region7: #{tpu_custom_call.1} parent=1 // loop_footer_branch
      %13 = sbr.rel target = $region3
    $region8: #{tpu_custom_call.1} parent=1 // loop_exit
      _
    %473 = vsyncpa [#allocation5], 1
    %s474 = scalar_lea.sflag [#allocation5], 1
    %475 = vsyncpa %s474, 1

</llo_original>
